<compile_context>
chip_gen: v6e
topology: v6e:2x2x1
jax: 0.10.0
libtpu: 0.0.40
codegen_flags: <defaults>
</compile_context>

<pallas_src>
import functools
import math

import jax
import jax.numpy as jnp
from jax.experimental import pallas as pl
from jax.experimental.pallas import tpu as pltpu


# ----------------------------------------------------------------------------- helpers
def _round_up(x, m):
    return ((x + m - 1) // m) * m


def _vmem_cap_bytes():
    """Generation-aware VMEM ceiling with headroom for Mosaic internal scratch,
    semaphores and double-buffer overshoot (v7x: 64 MiB/TC, v5e/v6e: 128 MiB)."""
    try:
        cap = int(pltpu.get_tpu_info().vmem_capacity_bytes)
    except Exception:  # conservative fallback if the query is unavailable
        cap = 64 * 1024 * 1024
    return max(cap - 12 * 1024 * 1024, 32 * 1024 * 1024)


def _vmem_limit_for(bytes_per_step):
    """Double-buffered pipeline estimate; None (chip default) for small tiles."""
    est = 2 * int(bytes_per_step)
    if est <= 16 * 1024 * 1024:
        return None
    return min(max(est * 3 // 2, 32 * 1024 * 1024), _vmem_cap_bytes())


def _pick_row_tile(rows, tm, per_row_bytes, fixed_bytes):
    """Row tile selection: multiple of 8, shrunk to fit the per-generation VMEM
    cap, and capped so the 'parallel' row axis yields >= 2 tiles when rows
    allow (so v7x's two TensorCores both get work)."""
    tm_eff = min(tm, _round_up(rows, 8))
    if 2 * (fixed_bytes + tm_eff * per_row_bytes) > 16 * 1024 * 1024:
        cap = _vmem_cap_bytes()
        while tm_eff > 64 and 2 * (fixed_bytes + tm_eff * per_row_bytes) > cap:
            tm_eff = max(_round_up(tm_eff // 2, 8), 8)
    if rows > 8 and _round_up(rows, tm_eff) // tm_eff < 2:
        tm_eff = min(tm_eff, _round_up((rows + 1) // 2, 8))
    rows_p = _round_up(rows, tm_eff)
    return tm_eff, rows_p


def _erf(x):
    # Abramowitz & Stegun 7.1.26 rational approximation (max abs err ~1.5e-7),
    # built only from mul/add/exp/where so it lowers cleanly in Mosaic.
    z = jnp.abs(x)
    t = 1.0 / (1.0 + 0.3275911 * z)
    poly = ((((1.061405429 * t - 1.453152027) * t + 1.421413741) * t
             - 0.284496736) * t + 0.254829592) * t
    y = 1.0 - poly * jnp.exp(-z * z)
    return jnp.where(x >= 0, y, -y)


def _gelu(x):
    # Matches the PyTorch reference: x * 0.5 * (1 + erf(x / sqrt(2)))
    return x * 0.5 * (1.0 + _erf(x * (1.0 / math.sqrt(2.0))))


# ----------------------------------------------------------------------------- kernels
def _linear_kernel(x_ref, w_ref, b_ref, o_ref, *, activation):
    """o = activation(x @ W + b).  The [K, N] weight block has a constant
    index_map, so it is fetched once and stays VMEM-resident across row tiles;
    no K grid axis / accumulator scratch needed for BERT-sized K."""
    y = jnp.dot(x_ref[...], w_ref[...], preferred_element_type=jnp.float32)
    y = y + b_ref[...].astype(jnp.float32)
    if activation == "gelu":
        y = _gelu(y)
    o_ref[...] = y.astype(o_ref.dtype)


def _linear_residual_ln_kernel(x_ref, w_ref, b_ref, r_ref, g_ref, bt_ref,
                               o_ref, *, eps):
    """o = LayerNorm(x @ W + b + residual) * gamma + beta  (BertSelfOutput)."""
    y = jnp.dot(x_ref[...], w_ref[...], preferred_element_type=jnp.float32)
    # TODO(synk): dropout before the residual add is identity in eval mode.
    y = y + b_ref[...].astype(jnp.float32) + r_ref[...].astype(jnp.float32)
    mean = jnp.mean(y, axis=-1, keepdims=True)
    c = y - mean
    var = jnp.mean(c * c, axis=-1, keepdims=True)
    out = c * jax.lax.rsqrt(var + eps)
    out = out * g_ref[...].astype(jnp.float32) + bt_ref[...].astype(jnp.float32)
    o_ref[...] = out.astype(o_ref.dtype)


def _ffn_kernel(x_ref, wi_ref, bi_ref, wo_ref, bo_ref, g_ref, bt_ref,
                o_ref, *, eps):
    """Fused BertIntermediate + BertOutput:
       o = LayerNorm(gelu(x @ Wi + bi) @ Wo + bo + x) * gamma + beta.
    The (rows, intermediate_size) activation never round-trips through HBM."""
    x = x_ref[...]
    h = jnp.dot(x, wi_ref[...], preferred_element_type=jnp.float32)
    h = _gelu(h + bi_ref[...].astype(jnp.float32))
    y = jnp.dot(h.astype(x.dtype), wo_ref[...],
                preferred_element_type=jnp.float32)
    y = y + bo_ref[...].astype(jnp.float32) + x.astype(jnp.float32)
    mean = jnp.mean(y, axis=-1, keepdims=True)
    c = y - mean
    var = jnp.mean(c * c, axis=-1, keepdims=True)
    out = c * jax.lax.rsqrt(var + eps)
    out = out * g_ref[...].astype(jnp.float32) + bt_ref[...].astype(jnp.float32)
    o_ref[...] = out.astype(o_ref.dtype)


def _attention_kernel(qkv_ref, m_ref, o_ref, *, num_heads, head_dim, scale):
    """All heads of one batch element per grid step.  qkv_ref: (1, S, 3H) with
    columns [q | k | v] in torch head-major order; writes a single lane-dense
    (S, H) context block — no HBM transposes around this kernel."""
    H = num_heads * head_dim
    dt = qkv_ref.dtype
    mask = m_ref[0, 0].astype(jnp.float32)                      # (1, S)
    ctx = []
    for h in range(num_heads):
        lo = h * head_dim
        q = qkv_ref[0, :, lo:lo + head_dim]                     # (S, d)
        k = qkv_ref[0, :, H + lo:H + lo + head_dim]             # (S, d)
        v = qkv_ref[0, :, 2 * H + lo:2 * H + lo + head_dim]     # (S, d)
        q = (q.astype(jnp.float32) * scale).astype(dt)          # fold 1/sqrt(d)
        s = jax.lax.dot_general(q, k, (((1,), (1,)), ((), ())),
                                preferred_element_type=jnp.float32)   # (S, S)
        s = s + mask
        s_max = jnp.max(s, axis=-1, keepdims=True)
        p = jnp.exp(s - s_max)
        denom = jnp.sum(p, axis=-1, keepdims=True)
        p = p * pl.reciprocal(denom, approx=False)
        # TODO(synk): attention-probs dropout and head_mask are identity here.
        ctx.append(jnp.dot(p.astype(dt), v,
                           preferred_element_type=jnp.float32))       # (S, d)
    o_ref[0] = jnp.concatenate(ctx, axis=-1).astype(o_ref.dtype)      # (S, H)


# ----------------------------------------------------------------------------- wrappers
def _fused_linear(x, w, b, *, activation=None, tm=512):
    """[rows, K] @ [K, N] + b, optional gelu.  Weight is VMEM-resident."""
    rows, K = x.shape
    _, N = w.shape
    isz = x.dtype.itemsize
    per_row = (K + N) * isz + N * 4
    fixed = K * N * isz + N * 4
    tm_eff, rows_p = _pick_row_tile(rows, tm, per_row, fixed)
    if rows_p != rows:
        x = jnp.pad(x, ((0, rows_p - rows), (0, 0)))
    vmem_limit = _vmem_limit_for(fixed + tm_eff * per_row)
    cost = pl.CostEstimate(
        flops=2 * rows_p * K * N,
        transcendentals=rows_p * N if activation == "gelu" else 0,
        bytes_accessed=(rows_p * K + rows_p * N) * isz + K * N * isz + N * 4)
    # TODO(synk): add a K/N grid axis if K*N weights ever exceed VMEM residency.
    out = pl.pallas_call(
        functools.partial(_linear_kernel, activation=activation),
        out_shape=jax.ShapeDtypeStruct((rows_p, N), x.dtype),
        grid=(rows_p // tm_eff,),
        in_specs=[
            pl.BlockSpec((tm_eff, K), lambda i: (i, 0)),   # activations
            pl.BlockSpec((K, N), lambda i: (0, 0)),        # weight (resident)
            pl.BlockSpec((1, N), lambda i: (0, 0)),        # bias
        ],
        out_specs=pl.BlockSpec((tm_eff, N), lambda i: (i, 0)),
        compiler_params=pltpu.CompilerParams(
            dimension_semantics=("parallel",),
            vmem_limit_bytes=vmem_limit),
        cost_estimate=cost,
    )(x, w, b.reshape(1, N))
    return out[:rows]


def _fused_linear_residual_ln(x, w, b, residual, gamma, beta, *, eps, tm=512):
    """LayerNorm(x @ W + b + residual) * gamma + beta.  Weight VMEM-resident."""
    rows, K = x.shape
    _, N = w.shape
    isz = x.dtype.itemsize
    per_row = (K + 2 * N) * isz + N * 4
    fixed = K * N * isz + 3 * N * 4
    tm_eff, rows_p = _pick_row_tile(rows, tm, per_row, fixed)
    if rows_p != rows:
        pad = ((0, rows_p - rows), (0, 0))
        x = jnp.pad(x, pad)
        residual = jnp.pad(residual, pad)
    vmem_limit = _vmem_limit_for(fixed + tm_eff * per_row)
    cost = pl.CostEstimate(
        flops=2 * rows_p * K * N,
        transcendentals=0,
        bytes_accessed=(rows_p * K + 2 * rows_p * N) * isz
                       + K * N * isz + 3 * N * 4)
    out = pl.pallas_call(
        functools.partial(_linear_residual_ln_kernel, eps=eps),
        out_shape=jax.ShapeDtypeStruct((rows_p, N), x.dtype),
        grid=(rows_p // tm_eff,),
        in_specs=[
            pl.BlockSpec((tm_eff, K), lambda i: (i, 0)),   # activations
            pl.BlockSpec((K, N), lambda i: (0, 0)),        # weight (resident)
            pl.BlockSpec((1, N), lambda i: (0, 0)),        # bias
            pl.BlockSpec((tm_eff, N), lambda i: (i, 0)),   # residual
            pl.BlockSpec((1, N), lambda i: (0, 0)),        # LN gamma
            pl.BlockSpec((1, N), lambda i: (0, 0)),        # LN beta
        ],
        out_specs=pl.BlockSpec((tm_eff, N), lambda i: (i, 0)),
        compiler_params=pltpu.CompilerParams(
            dimension_semantics=("parallel",),
            vmem_limit_bytes=vmem_limit),
        cost_estimate=cost,
    )(x, w, b.reshape(1, N), residual, gamma.reshape(1, N), beta.reshape(1, N))
    return out[:rows]


def _fused_ffn(x, wi, bi, wo, bo, gamma, beta, *, eps, tm=512):
    """Fused BertIntermediate + BertOutput (gelu GEMM -> GEMM -> residual+LN)."""
    rows, H = x.shape
    _, I = wi.shape
    isz = x.dtype.itemsize
    per_row = 2 * H * isz + I * 4 + I * isz + H * 4
    fixed = 2 * H * I * isz + (I + 3 * H) * 4
    tm_eff, rows_p = _pick_row_tile(rows, tm, per_row, fixed)
    if rows_p != rows:
        x = jnp.pad(x, ((0, rows_p - rows), (0, 0)))
    vmem_limit = _vmem_limit_for(fixed + tm_eff * per_row)
    cost = pl.CostEstimate(
        flops=4 * rows_p * H * I,
        transcendentals=rows_p * I,
        bytes_accessed=2 * rows_p * H * isz + 2 * H * I * isz + (I + 3 * H) * 4)
    out = pl.pallas_call(
        functools.partial(_ffn_kernel, eps=eps),
        out_shape=jax.ShapeDtypeStruct((rows_p, H), x.dtype),
        grid=(rows_p // tm_eff,),
        in_specs=[
            pl.BlockSpec((tm_eff, H), lambda i: (i, 0)),   # x (also the residual)
            pl.BlockSpec((H, I), lambda i: (0, 0)),        # Wi (resident)
            pl.BlockSpec((1, I), lambda i: (0, 0)),        # bi
            pl.BlockSpec((I, H), lambda i: (0, 0)),        # Wo (resident)
            pl.BlockSpec((1, H), lambda i: (0, 0)),        # bo
            pl.BlockSpec((1, H), lambda i: (0, 0)),        # LN gamma
            pl.BlockSpec((1, H), lambda i: (0, 0)),        # LN beta
        ],
        out_specs=pl.BlockSpec((tm_eff, H), lambda i: (i, 0)),
        compiler_params=pltpu.CompilerParams(
            dimension_semantics=("parallel",),
            vmem_limit_bytes=vmem_limit),
        cost_estimate=cost,
    )(x, wi, bi.reshape(1, I), wo, bo.reshape(1, H),
      gamma.reshape(1, H), beta.reshape(1, H))
    return out[:rows]


def _attention(qkv3, attention_mask, *, num_heads, head_dim, out_dtype):
    """qkv3: [B, S, 3H] fused projections; attention_mask: [B, 1, 1, S] (f32)."""
    B, S, threeH = qkv3.shape
    H = num_heads * head_dim
    scale = 1.0 / math.sqrt(head_dim)
    isz = qkv3.dtype.itemsize
    # TODO(synk): for very long sequences use a flash-style online-softmax kernel
    # with a KV-tile grid axis; full softmax per batch is fine for BERT (S<=512).
    per_step = S * threeH * isz + S * H * isz + S * 4 \
               + 2 * S * S * 4 + num_heads * S * head_dim * 4
    cost = pl.CostEstimate(
        flops=4 * B * num_heads * S * S * head_dim,
        transcendentals=B * num_heads * S * S,
        bytes_accessed=4 * B * S * H * isz + B * S * 4)
    return pl.pallas_call(
        functools.partial(_attention_kernel, num_heads=num_heads,
                          head_dim=head_dim, scale=scale),
        out_shape=jax.ShapeDtypeStruct((B, S, H), out_dtype),
        grid=(B,),
        in_specs=[
            pl.BlockSpec((1, S, threeH), lambda b: (b, 0, 0)),
            pl.BlockSpec((1, 1, 1, S), lambda b: (b, 0, 0, 0)),
        ],
        out_specs=pl.BlockSpec((1, S, H), lambda b: (b, 0, 0)),
        compiler_params=pltpu.CompilerParams(
            dimension_semantics=("parallel",),
            vmem_limit_bytes=_vmem_limit_for(per_step)),
        cost_estimate=cost,
    )(qkv3, attention_mask)


# ----------------------------------------------------------------------------- BertLayer
def prepare_params(p, dtype=None):
    """One-time weight prep OUTSIDE the kernels: torch Linear weights [out, in]
    are transposed to [in, out], Q/K/V are concatenated into one [H, 3H] GEMM,
    and (optionally) the big weight matrices are cast once to bf16 for serving.
    Biases and LayerNorm params stay f32 — all epilogue math runs in f32."""
    wcast = (lambda a: a.astype(dtype)) if dtype is not None else (lambda a: a)
    f32 = lambda a: a.astype(jnp.float32)
    return dict(
        w_qkv=wcast(jnp.concatenate([p["wq"].T, p["wk"].T, p["wv"].T], axis=1)),
        b_qkv=f32(jnp.concatenate([p["bq"], p["bk"], p["bv"]])),
        w_ao=wcast(p["wao"].T), b_ao=f32(p["bao"]),
        ln1_g=f32(p["ln1_g"]), ln1_b=f32(p["ln1_b"]),
        w_i=wcast(p["wi"].T), b_i=f32(p["bi"]),
        w_o=wcast(p["wo"].T), b_o=f32(p["bo"]),
        ln2_g=f32(p["ln2_g"]), ln2_b=f32(p["ln2_b"]),
    )


def bert_layer(hidden_states, attention_mask, prep, *, num_heads,
               eps=1e-12, tm=512):
    """hidden_states: [B, S, H]; attention_mask: [B, 1, 1, S] additive mask."""
    B, S, H = hidden_states.shape
    assert H % num_heads == 0
    d = H // num_heads
    rows = B * S
    cdt = prep["w_qkv"].dtype                       # compute dtype (f32 or bf16)
    hs2 = hidden_states.astype(cdt).reshape(rows, H)
    mask = attention_mask.astype(jnp.float32)

    # --- BertSelfAttention: fused QKV GEMM + all-heads-per-batch attention.
    #     Only free reshapes between kernels — no HBM transposes.
    qkv = _fused_linear(hs2, prep["w_qkv"], prep["b_qkv"], tm=tm)   # (rows, 3H)
    ctx = _attention(qkv.reshape(B, S, 3 * H), mask,
                     num_heads=num_heads, head_dim=d, out_dtype=cdt)
    ctx = ctx.reshape(rows, H)

    # --- BertSelfOutput: dense + (eval dropout) + residual + LayerNorm
    attn_out = _fused_linear_residual_ln(
        ctx, prep["w_ao"], prep["b_ao"], hs2,
        prep["ln1_g"], prep["ln1_b"], eps=eps, tm=tm)

    # --- BertIntermediate + BertOutput fused (intermediate stays in VMEM)
    out = _fused_ffn(attn_out, prep["w_i"], prep["b_i"], prep["w_o"],
                     prep["b_o"], prep["ln2_g"], prep["ln2_b"], eps=eps, tm=tm)
    return out.reshape(B, S, H)


# ----------------------------------------------------------------------------- reference
def _reference_bert_layer(hidden_states, attention_mask, p, *, num_heads, eps):
    B, S, H = hidden_states.shape
    d = H // num_heads
    hp = jax.lax.Precision.HIGHEST

    def linear(x, w, b):                      # torch-style weight [out, in]
        return jnp.einsum("...i,oi->...o", x, w, precision=hp) + b

    def split_heads(x):
        return x.reshape(B, S, num_heads, d).transpose(0, 2, 1, 3)

    def layer_norm(x, g, b):
        m = jnp.mean(x, axis=-1, keepdims=True)
        var = jnp.mean((x - m) ** 2, axis=-1, keepdims=True)
        return (x - m) * jax.lax.rsqrt(var + eps) * g + b

    q = split_heads(linear(hidden_states, p["wq"], p["bq"]))
    k = split_heads(linear(hidden_states, p["wk"], p["bk"]))
    v = split_heads(linear(hidden_states, p["wv"], p["bv"]))
    scores = jnp.einsum("bhqd,bhkd->bhqk", q, k, precision=hp) / math.sqrt(d)
    scores = scores + attention_mask
    probs = jax.nn.softmax(scores, axis=-1)
    ctx = jnp.einsum("bhqk,bhkd->bhqd", probs, v, precision=hp)
    ctx = ctx.transpose(0, 2, 1, 3).reshape(B, S, H)

    attn_out = layer_norm(linear(ctx, p["wao"], p["bao"]) + hidden_states,
                          p["ln1_g"], p["ln1_b"])
    inter = linear(attn_out, p["wi"], p["bi"])
    inter = inter * 0.5 * (1.0 + jax.scipy.special.erf(inter / math.sqrt(2.0)))
    out = layer_norm(linear(inter, p["wo"], p["bo"]) + attn_out,
                     p["ln2_g"], p["ln2_b"])
    return out


# ----------------------------------------------------------------------------- test
if __name__ == "__main__":
    B, S, H, NH = 2, 8, 128, 4          # hidden=128, 4 heads (d=32), seq=8, batch=2
    I = 4 * H                           # intermediate_size
    eps = 1e-12
    f32 = jnp.float32

    key = jax.random.PRNGKey(0)
    keys = jax.random.split(key, 17)

    hidden_states = jax.random.normal(keys[0], (B, S, H), dtype=f32)
    mask2d = jnp.ones((B, S), dtype=f32).at[1, -2:].set(0.0)        # pad 2 tokens of batch 1
    attention_mask = (1.0 - mask2d)[:, None, None, :] * -10000.0    # BERT extended mask

    def lin_init(kw, kb, out_f, in_f):
        w = jax.random.normal(kw, (out_f, in_f), dtype=f32) * 0.02
        b = jax.random.normal(kb, (out_f,), dtype=f32) * 0.02
        return w, b

    wq, bq = lin_init(keys[1], keys[2], H, H)
    wk, bk = lin_init(keys[3], keys[4], H, H)
    wv, bv = lin_init(keys[5], keys[6], H, H)
    wao, bao = lin_init(keys[7], keys[8], H, H)
    wi, bi = lin_init(keys[9], keys[10], I, H)
    wo, bo = lin_init(keys[11], keys[12], H, I)
    ln1_g = 1.0 + 0.1 * jax.random.normal(keys[13], (H,), dtype=f32)
    ln1_b = 0.1 * jax.random.normal(keys[14], (H,), dtype=f32)
    ln2_g = 1.0 + 0.1 * jax.random.normal(keys[15], (H,), dtype=f32)
    ln2_b = 0.1 * jax.random.normal(keys[16], (H,), dtype=f32)

    torch_params = dict(wq=wq, bq=bq, wk=wk, bk=bk, wv=wv, bv=bv,
                        wao=wao, bao=bao, wi=wi, bi=bi, wo=wo, bo=bo,
                        ln1_g=ln1_g, ln1_b=ln1_b, ln2_g=ln2_g, ln2_b=ln2_b)

    ref = _reference_bert_layer(hidden_states, attention_mask, torch_params,
                                num_heads=NH, eps=eps)

    # f32 path — checked against the reference (tolerance covers MXU f32
    # matmul-pass rounding vs. the HIGHEST-precision XLA reference).
    prep = prepare_params(torch_params)
    out = bert_layer(hidden_states, attention_mask, prep, num_heads=NH, eps=eps)
    out = jax.block_until_ready(out)
    assert out.shape == (B, S, H)
    max_err = float(jnp.max(jnp.abs(out - ref)))
    assert max_err < 2e-2, f"mismatch vs reference (max abs err {max_err:.3e})"

    # bf16 serving path (review: the single largest perf lever) — weights and
    # activations bf16, accumulation/epilogues f32; loose sanity check only.
    prep_bf16 = prepare_params(torch_params, dtype=jnp.bfloat16)
    out_bf16 = jax.block_until_ready(
        bert_layer(hidden_states, attention_mask, prep_bf16,
                   num_heads=NH, eps=eps))
    assert out_bf16.shape == (B, S, H)
    assert bool(jnp.all(jnp.isfinite(out_bf16.astype(f32))))
    bf16_err = float(jnp.max(jnp.abs(out_bf16.astype(f32) - ref)))
    assert bf16_err < 0.25, f"bf16 path diverged (max abs err {bf16_err:.3e})"

    print("KERNEL_OK")
</pallas_src>

<mosaic_0001>
module attributes {stable_mosaic.version = 11 : i64} {
  func.func @_linear_kernel(%arg0: i32, %arg1: memref<8x128xf32, #tpu.memory_space<vmem>>, %arg2: memref<128x384xf32, #tpu.memory_space<vmem>>, %arg3: memref<1x384xf32, #tpu.memory_space<vmem>>, %arg4: memref<8x384xf32, #tpu.memory_space<vmem>>) attributes {dimension_semantics = [#tpu.dimension_semantics<parallel>], iteration_bounds = array<i64: 2>, scalar_prefetch = 0 : i64, scratch_operands = 0 : i64, tpu.core_type = #tpu.core_type<tc>, window_params = [{transform_indices = @transform_0, window_bounds = array<i64: 8, 128>}, {pipeline_mode = #tpu.pipeline_mode<synchronous>, transform_indices = @transform_1, window_bounds = array<i64: 128, 384>}, {pipeline_mode = #tpu.pipeline_mode<synchronous>, transform_indices = @transform_2, window_bounds = array<i64: 1, 384>}, {transform_indices = @transform_3, window_bounds = array<i64: 8, 384>}]} {
    %c0 = arith.constant 0 : index
    %c0_0 = arith.constant 0 : index
    %0 = vector.load %arg1[%c0, %c0_0] : memref<8x128xf32, #tpu.memory_space<vmem>>, vector<8x128xf32>
    %c0_1 = arith.constant 0 : index
    %c0_2 = arith.constant 0 : index
    %1 = vector.load %arg2[%c0_1, %c0_2] : memref<128x384xf32, #tpu.memory_space<vmem>>, vector<128x384xf32>
    %cst = arith.constant dense<0.000000e+00> : vector<8x384xf32>
    %2 = tpu.matmul %0, %1, %cst {dimension_numbers = #tpu.dot_dimension_numbers<[1], [0], [0], [1], [0, 0, 1, 1], [], []>} : vector<8x128xf32>, vector<128x384xf32>, vector<8x384xf32> -> vector<8x384xf32>
    %c0_3 = arith.constant 0 : index
    %c0_4 = arith.constant 0 : index
    %3 = vector.load %arg3[%c0_3, %c0_4] : memref<1x384xf32, #tpu.memory_space<vmem>>, vector<1x384xf32>
    %4 = vector.broadcast %3 : vector<1x384xf32> to vector<8x384xf32>
    %5 = arith.addf %2, %4 : vector<8x384xf32>
    %c0_5 = arith.constant 0 : index
    %c0_6 = arith.constant 0 : index
    %6 = vector.load %arg4[%c0_5, %c0_6] : memref<8x384xf32, #tpu.memory_space<vmem>>, vector<8x384xf32>
    tpu.vector_store %arg4[%c0_5, %c0_6], %5 {strides = array<i32>} : memref<8x384xf32, #tpu.memory_space<vmem>>, vector<8x384xf32>,
    return
  }
  func.func @transform_0(%arg0: i32) -> (i32, i32) {
    %c0_i32 = arith.constant 0 : i32
    %c0_i32_0 = arith.constant 0 : i32
    return %arg0, %c0_i32 : i32, i32
  }
  func.func @transform_1(%arg0: i32) -> (i32, i32) {
    %c0_i32 = arith.constant 0 : i32
    %c0_i32_0 = arith.constant 0 : i32
    %c0_i32_1 = arith.constant 0 : i32
    return %c0_i32, %c0_i32_0 : i32, i32
  }
  func.func @transform_2(%arg0: i32) -> (i32, i32) {
    %c0_i32 = arith.constant 0 : i32
    %c0_i32_0 = arith.constant 0 : i32
    %c0_i32_1 = arith.constant 0 : i32
    return %c0_i32, %c0_i32_0 : i32, i32
  }
  func.func @transform_3(%arg0: i32) -> (i32, i32) {
    %c0_i32 = arith.constant 0 : i32
    %c0_i32_0 = arith.constant 0 : i32
    return %arg0, %c0_i32 : i32, i32
  }
}

</mosaic_0001>

<llo_original>
// kernel: tpu_custom_call.1
$region0: #{tpu_custom_call.1}
  #allocation0 [shape = 'u32[]', space=smem, size = 0x4, offset = 0x4, fixed_abs, tag = 'smem constant byte address 0x4 - core index']
  #allocation1 [shape = 'u32[144,128]{1,0:T(1,128)}', space=vmem, size = 0x12000, scoped, tag = 'internal scratch']
  %s0 = inlined_call_operand.hbm [shape: f32[16,128], index: 0, kind: input, shape index: {}]
  %s1 = inlined_call_operand.hbm [shape: f32[128,384], index: 1, kind: input, shape index: {}]
  %s2 = inlined_call_operand.vmem [shape: f32[1,384], index: 2, kind: input, shape index: {}]
  %s3 = inlined_call_operand.hbm [shape: f32[16,384], index: 3, kind: output, shape index: {}]
  %s4 = sld [smem:[#allocation0]]
  $region53: #{tpu_custom_call.1} parent=0
    _
  %s6 = ssub.s32 1, %s4
  %s7 = scalar_select 0, %s6, %s4
  $region1: #{tpu_custom_call.1} parent=0
    #allocation2 [shape = 'u8[8192]{0}', space=vmem, size = 0x2000, scoped, tag = 'input window, operand 0']
    #allocation3 [shape = 's32[2]{0}', space=sflag, size = 0x8, scoped, tag = 'scoped memory for tpu_custom_call.1']
    #allocation4 [shape = 's32[2]{0}', space=sflag, size = 0x8, scoped, tag = 'scoped memory for tpu_custom_call.1']
    #allocation5 [shape = 'u8[196608]{0}', space=vmem, size = 0x30000, scoped, tag = 'input window, operand 1, single buffered']
    #allocation6 [shape = 's32[1]{0}', space=sflag, size = 0x4, scoped, tag = 'scoped memory for tpu_custom_call.1']
    #allocation7 [shape = 'u8[24576]{0}', space=vmem, size = 0x6000, scoped, tag = 'output window, operand 0']
    %8 = vsyncpa [#allocation3], 0
    %s9 = scalar_lea.sflag [#allocation3], 1
    %10 = vsyncpa %s9, 0
    %11 = vsyncpa [#allocation6], 0
    %12 = vsyncpa [#allocation4], 0
    %s13 = scalar_lea.sflag [#allocation4], 1
    %14 = vsyncpa %s13, 0
    loop: start=0, step=1, limit=4
    $region2: #{tpu_custom_call.1} parent=1 // loop_pre_header
      _
    $region3: #{tpu_custom_call.1} parent=1 // loop_header
      %s16 = sphi 0, %s20
      %p17 = scmp.ge.s32.totalorder %s16, 4
      %s26 = sphi 0, %s28
      %s29 = sphi 0, %s26
      %s30 = sphi 0, %s29
      %s46 = sphi 0, %s30
      %s50 = sphi 0, %s50
      %s52 = sphi 0, %s50
      %s53 = sphi 0, %s52
      %s67 = sphi 0, %s53
      %s71 = sphi 0, %s71
      %s73 = sphi 0, %s71
      %s74 = sphi 0, %s73
      %s88 = sphi 0, %s74
      %s94 = sphi 0, %s96
      %s97 = sphi 0, %s94
      %s98 = sphi 0, %s97
      %s114 = sphi 0, %s98
    $region4: #{tpu_custom_call.1} parent=1 // loop_header_branch
      %19 = sbr.rel (%p17) target = $region8
    $region5: #{tpu_custom_call.1} parent=1 // loop_body
      %s21 = ssub.s32 %s16, 1
      %s22 = ssub.s32 %s16, 2
      %s23 = sadd.s32 %s16, 1
      %s24 = ssub.s32 %s16, %s23
      %p25 = scmp.eq.s32.totalorder %s24, 0
      %s27 = sadd.s32 %s26, 1
      %s28 = scalar_select %p25, %s26, %s27
      %p31 = pneg %p25
      %p32 = scmp.eq.s32.totalorder %s16, 1
      %p33 = por %p31, %p32
      %p34 = scmp.ne.s32.totalorder %s26, %s29
      %p35 = scmp.eq.s32.totalorder %s16, 0
      %p36 = por %p34, %p35
      %p37 = scmp.ne.s32.totalorder %s26, %s29
      %p38 = scmp.eq.s32.totalorder %s21, 1
      %p39 = por %p37, %p38
      %p40 = scmp.ne.s32.totalorder %s29, %s30
      %p41 = scmp.eq.s32.totalorder %s21, 0
      %p42 = por %p40, %p41
      %p43 = scmp.ne.s32.totalorder %s29, %s30
      %p44 = scmp.eq.s32.totalorder %s22, 1
      %p45 = por %p43, %p44
      %p47 = scmp.ne.s32.totalorder %s30, %s46
      %p48 = scmp.eq.s32.totalorder %s22, 0
      %p49 = por %p47, %p48
      %s51 = sadd.s32 %s50, 1
      %p54 = scmp.eq.s32.totalorder %s16, 1
      %p55 = scmp.ne.s32.totalorder %s50, %s52
      %p56 = scmp.eq.s32.totalorder %s16, 0
      %p57 = por %p55, %p56
      %p58 = scmp.ne.s32.totalorder %s50, %s52
      %p59 = scmp.eq.s32.totalorder %s21, 1
      %p60 = por %p58, %p59
      %p61 = scmp.ne.s32.totalorder %s52, %s53
      %p62 = scmp.eq.s32.totalorder %s21, 0
      %p63 = por %p61, %p62
      %p64 = scmp.ne.s32.totalorder %s52, %s53
      %p65 = scmp.eq.s32.totalorder %s22, 1
      %p66 = por %p64, %p65
      %p68 = scmp.ne.s32.totalorder %s53, %s67
      %p69 = scmp.eq.s32.totalorder %s22, 0
      %p70 = por %p68, %p69
      %s72 = sadd.s32 %s71, 1
      %p75 = scmp.eq.s32.totalorder %s16, 1
      %p76 = scmp.ne.s32.totalorder %s71, %s73
      %p77 = scmp.eq.s32.totalorder %s16, 0
      %p78 = por %p76, %p77
      %p79 = scmp.ne.s32.totalorder %s71, %s73
      %p80 = scmp.eq.s32.totalorder %s21, 1
      %p81 = por %p79, %p80
      %p82 = scmp.ne.s32.totalorder %s73, %s74
      %p83 = scmp.eq.s32.totalorder %s21, 0
      %p84 = por %p82, %p83
      %p85 = scmp.ne.s32.totalorder %s73, %s74
      %p86 = scmp.eq.s32.totalorder %s22, 1
      %p87 = por %p85, %p86
      %p89 = scmp.ne.s32.totalorder %s74, %s88
      %p90 = scmp.eq.s32.totalorder %s22, 0
      %p91 = por %p89, %p90
      %s92 = ssub.s32 %s16, %s23
      %p93 = scmp.eq.s32.totalorder %s92, 0
      %s95 = sadd.s32 %s94, 1
      %s96 = scalar_select %p93, %s94, %s95
      %p99 = pneg %p93
      %p100 = scmp.eq.s32.totalorder %s16, 1
      %p101 = por %p99, %p100
      %p102 = scmp.ne.s32.totalorder %s94, %s97
      %p103 = scmp.eq.s32.totalorder %s16, 0
      %p104 = por %p102, %p103
      %p105 = scmp.ne.s32.totalorder %s94, %s97
      %p106 = scmp.eq.s32.totalorder %s21, 1
      %p107 = por %p105, %p106
      %p108 = scmp.ne.s32.totalorder %s97, %s98
      %p109 = scmp.eq.s32.totalorder %s21, 0
      %p110 = por %p108, %p109
      %p111 = scmp.ne.s32.totalorder %s97, %s98
      %p112 = scmp.eq.s32.totalorder %s22, 1
      %p113 = por %p111, %p112
      %p115 = scmp.ne.s32.totalorder %s98, %s114
      %p116 = scmp.eq.s32.totalorder %s22, 0
      %p117 = por %p115, %p116
      %p118 = scmp.le.s32.totalorder 1, %s16
      %p119 = scmp.lt.s32.totalorder %s16, 3
      %p120 = pnand %p118, %p119
      %p121 = pneg %p120
      // Predicated region
      $region9: #{tpu_custom_call.1} parent=5 // pred_check
        _
      $region10: #{tpu_custom_call.1} parent=5 // pred_check_branch
        %123 = sbr.rel (%p120) target = $region12
      $region11: #{tpu_custom_call.1} parent=5 // pred_region
        %s124 = ssub.s32 %s16, 1
        // Predicated region
        $region13: #{tpu_custom_call.1} parent=11 // pred_check
          %p125 = pneg %p63
        $region14: #{tpu_custom_call.1} parent=11 // pred_check_branch
          %127 = sbr.rel (%p125) target = $region16
        $region15: #{tpu_custom_call.1} parent=11 // pred_region
          %s129 = ssub.s32 6144, 6144
          %130 = vsyncadd [#allocation6], %s129
          %s131 = sshll.u32 [#allocation5], 4
          %s132 = int_to_ptr.vmem [resolvable:$true] %s131
          %137 = dma.hbm_to_vmem [thread:$0]  %s1, 6144, %s132, [#allocation6], 384, 384, 24
        $region16: #{tpu_custom_call.1} parent=11 // pred_fallthru
          _
        // Predicated region
        $region17: #{tpu_custom_call.1} parent=11 // pred_check
          %p138 = pneg %p84
        $region18: #{tpu_custom_call.1} parent=11 // pred_check_branch
          %140 = sbr.rel (%p138) target = $region20
        $region19: #{tpu_custom_call.1} parent=11 // pred_region
          _
        $region20: #{tpu_custom_call.1} parent=11 // pred_fallthru
          _
      $region12: #{tpu_custom_call.1} parent=5 // pred_fallthru
        _
      %p141 = scmp.lt.s32.totalorder %s16, 2
      // Predicated region
      $region21: #{tpu_custom_call.1} parent=5 // pred_check
        %p142 = pneg %p141
      $region22: #{tpu_custom_call.1} parent=5 // pred_check_branch
        %144 = sbr.rel (%p142) target = $region24
      $region23: #{tpu_custom_call.1} parent=5 // pred_region
        // Predicated region
        $region25: #{tpu_custom_call.1} parent=23 // pred_check
          %p145 = pneg %p36
        $region26: #{tpu_custom_call.1} parent=23 // pred_check_branch
          %147 = sbr.rel (%p145) target = $region28
        $region27: #{tpu_custom_call.1} parent=23 // pred_region
          %s148 = sand.u32 %s26, 1
          %s149 = scalar_lea.sflag [#allocation3], %s148
          %s150 = sand.u32 %s26, 1
          %s151 = smul.addr %s150, 8
          %s152 = scalar_lea.vmem [#allocation2], %s151
          %s154 = ssub.s32 128, 128
          %155 = vsyncadd %s149, %s154
          %s156 = smul.addr %s16, 128
          %s157 = scalar_lea.hbm %s0, %s156
          %s159 = sshll.u32 %s152, 4
          %s160 = int_to_ptr.vmem [resolvable:$true] %s159
          %162 = dma.hbm_to_vmem [thread:$0]  %s157, 128, %s160, %s149
        $region28: #{tpu_custom_call.1} parent=23 // pred_fallthru
          _
      $region24: #{tpu_custom_call.1} parent=5 // pred_fallthru
        _
      %p163 = scmp.le.s32.totalorder 1, %s16
      %p164 = scmp.lt.s32.totalorder %s16, 3
      %p165 = pnand %p163, %p164
      %p166 = pneg %p165
      // Predicated region
      $region29: #{tpu_custom_call.1} parent=5 // pred_check
        _
      $region30: #{tpu_custom_call.1} parent=5 // pred_check_branch
        %168 = sbr.rel (%p165) target = $region32
      $region31: #{tpu_custom_call.1} parent=5 // pred_region
        %s169 = ssub.s32 %s16, 1
        %s170 = sand.u32 %s29, 1
        %s171 = scalar_lea.sflag [#allocation3], %s170
        %s172 = sand.u32 %s29, 1
        %s173 = smul.addr %s172, 8
        %s174 = scalar_lea.vmem [#allocation2], %s173
        // Predicated region
        $region33: #{tpu_custom_call.1} parent=31 // pred_check
          %p175 = pneg %p42
        $region34: #{tpu_custom_call.1} parent=31 // pred_check_branch
          %177 = sbr.rel (%p175) target = $region36
        $region35: #{tpu_custom_call.1} parent=31 // pred_region
          %178 = dma.done %s171, 128
        $region36: #{tpu_custom_call.1} parent=31 // pred_fallthru
          _
        // Predicated region
        $region37: #{tpu_custom_call.1} parent=31 // pred_check
          %p179 = pneg %p63
        $region38: #{tpu_custom_call.1} parent=31 // pred_check_branch
          %181 = sbr.rel (%p179) target = $region40
        $region39: #{tpu_custom_call.1} parent=31 // pred_region
          %182 = dma.done [#allocation6], 6144
        $region40: #{tpu_custom_call.1} parent=31 // pred_fallthru
          _
        %s183 = sand.u32 %s29, 1
        %s184 = scalar_lea.sflag [#allocation3], %s183
        %s185 = sand.u32 %s29, 1
        %s186 = smul.addr %s185, 8
        %s187 = scalar_lea.vmem [#allocation2], %s186
        %p188 = pneg %p42
        %p189 = pneg %p39
        %p190 = pneg %p63
        %p191 = pneg %p60
        %p192 = pneg %p84
        %p193 = pneg %p81
        %p194 = pneg %p110
        %p195 = pneg %p107
        %s196 = sand.u32 %s97, 1
        %s197 = scalar_lea.sflag [#allocation4], %s196
        %s198 = sand.u32 %s97, 1
        %s199 = smul.addr %s198, 24
        %s200 = scalar_lea.vmem [#allocation7], %s199
        %v201 = vld [vmem:[%s174] sm:$0xff]
        %v202 = vld [vmem:[#allocation5] sm:$0xff]
        %v203 = vld [vmem:[#allocation5 + $0x8] sm:$0xff]
        %v204 = vld [vmem:[#allocation5 + $0x10] sm:$0xff]
        %v205 = vld [vmem:[#allocation5 + $0x18] sm:$0xff]
        %v206 = vld [vmem:[#allocation5 + $0x20] sm:$0xff]
        %v207 = vld [vmem:[#allocation5 + $0x28] sm:$0xff]
        %v208 = vld [vmem:[#allocation5 + $0x30] sm:$0xff]
        %v209 = vld [vmem:[#allocation5 + $0x38] sm:$0xff]
        %v210 = vld [vmem:[#allocation5 + $0x40] sm:$0xff]
        %v211 = vld [vmem:[#allocation5 + $0x48] sm:$0xff]
        %v212 = vld [vmem:[#allocation5 + $0x50] sm:$0xff]
        %v213 = vld [vmem:[#allocation5 + $0x58] sm:$0xff]
        %v214 = vld [vmem:[#allocation5 + $0x60] sm:$0xff]
        %v215 = vld [vmem:[#allocation5 + $0x68] sm:$0xff]
        %v216 = vld [vmem:[#allocation5 + $0x70] sm:$0xff]
        %v217 = vld [vmem:[#allocation5 + $0x78] sm:$0xff]
        %v218 = vld [vmem:[#allocation5 + $0x80] sm:$0xff]
        %v219 = vld [vmem:[#allocation5 + $0x88] sm:$0xff]
        %v220 = vld [vmem:[#allocation5 + $0x90] sm:$0xff]
        %v221 = vld [vmem:[#allocation5 + $0x98] sm:$0xff]
        %v222 = vld [vmem:[#allocation5 + $0xa0] sm:$0xff]
        %v223 = vld [vmem:[#allocation5 + $0xa8] sm:$0xff]
        %v224 = vld [vmem:[#allocation5 + $0xb0] sm:$0xff]
        %v225 = vld [vmem:[#allocation5 + $0xb8] sm:$0xff]
        %v226 = vld [vmem:[#allocation5 + $0xc0] sm:$0xff]
        %v227 = vld [vmem:[#allocation5 + $0xc8] sm:$0xff]
        %v228 = vld [vmem:[#allocation5 + $0xd0] sm:$0xff]
        %v229 = vld [vmem:[#allocation5 + $0xd8] sm:$0xff]
        %v230 = vld [vmem:[#allocation5 + $0xe0] sm:$0xff]
        %v231 = vld [vmem:[#allocation5 + $0xe8] sm:$0xff]
        %v232 = vld [vmem:[#allocation5 + $0xf0] sm:$0xff]
        %v233 = vld [vmem:[#allocation5 + $0xf8] sm:$0xff]
        %v234 = vld [vmem:[#allocation5 + $0x100] sm:$0xff]
        %v235 = vld [vmem:[#allocation5 + $0x108] sm:$0xff]
        %v236 = vld [vmem:[#allocation5 + $0x110] sm:$0xff]
        %v237 = vld [vmem:[#allocation5 + $0x118] sm:$0xff]
        %v238 = vld [vmem:[#allocation5 + $0x120] sm:$0xff]
        %v239 = vld [vmem:[#allocation5 + $0x128] sm:$0xff]
        %v240 = vld [vmem:[#allocation5 + $0x130] sm:$0xff]
        %v241 = vld [vmem:[#allocation5 + $0x138] sm:$0xff]
        %v242 = vld [vmem:[#allocation5 + $0x140] sm:$0xff]
        %v243 = vld [vmem:[#allocation5 + $0x148] sm:$0xff]
        %v244 = vld [vmem:[#allocation5 + $0x150] sm:$0xff]
        %v245 = vld [vmem:[#allocation5 + $0x158] sm:$0xff]
        %v246 = vld [vmem:[#allocation5 + $0x160] sm:$0xff]
        %v247 = vld [vmem:[#allocation5 + $0x168] sm:$0xff]
        %v248 = vld [vmem:[#allocation5 + $0x170] sm:$0xff]
        %v249 = vld [vmem:[#allocation5 + $0x178] sm:$0xff]
        %v250 = vld [vmem:[%s2] sm:$0x7]
        %v252 = vlaneseq
        %v253 = vshrl.u32 %v252, 7
        %v254 = vsub.s32 0, %v253
        %v255 = vrot.slane %v250, %v254
        %v256 = vlaneseq
        %v257 = vshrl.u32 %v256, 7
        %v258 = vsub.s32 1, %v257
        %v259 = vrot.slane %v250, %v258
        %v260 = vlaneseq
        %v261 = vshrl.u32 %v260, 7
        %v262 = vsub.s32 2, %v261
        %v263 = vrot.slane %v250, %v262
        %267 = vmatprep.subr.mxu0 %v248
        %268 = vmatpush1.msra.mxu0 %v247
        %269 = vmatprep.subr.mxu0 %v245
        %270 = vmatpush1.msra.mxu0 %v244
        %271 = vmatprep.subr.mxu0 %v242
        %272 = vmatpush1.msra.mxu0 %v241
        %273 = vmatprep.subr.mxu0 %v239
        %274 = vmatpush1.msra.mxu0 %v238
        %275 = vmatprep.subr.mxu0 %v236
        %276 = vmatpush1.msra.mxu0 %v235
        %277 = vmatprep.subr.mxu0 %v233
        %278 = vmatpush1.msra.mxu0 %v232
        %279 = vmatprep.subr.mxu0 %v230
        %280 = vmatpush1.msra.mxu0 %v229
        %281 = vmatprep.subr.mxu0 %v227
        %282 = vmatpush1.msra.mxu0 %v226
        %283 = vmatprep.subr.mxu0 %v224
        %284 = vmatpush1.msra.mxu0 %v223
        %285 = vmatprep.subr.mxu0 %v221
        %286 = vmatpush1.msra.mxu0 %v220
        %287 = vmatprep.subr.mxu0 %v218
        %288 = vmatpush1.msra.mxu0 %v217
        %289 = vmatprep.subr.mxu0 %v215
        %290 = vmatpush1.msra.mxu0 %v214
        %291 = vmatprep.subr.mxu0 %v212
        %292 = vmatpush1.msra.mxu0 %v211
        %293 = vmatprep.subr.mxu0 %v209
        %294 = vmatpush1.msra.mxu0 %v208
        %295 = vmatprep.subr.mxu0 %v206
        %296 = vmatpush1.msra.mxu0 %v205
        %297 = vmatprep.subr.mxu0 %v203
        %298 = vmatpush1.msra.mxu0 %v202
        %299 = vmatprep.subr.mxu0 0.0
        %300 = vmatpush2.msra.mxu0 0.0
        %301 = vmatprep.subr.mxu0 0.0
        %302 = vmatpush2.msra.mxu0 0.0
        %303 = vmatprep.subr.mxu0 0.0
        %304 = vmatpush2.msra.mxu0 0.0
        %305 = vmatprep.subr.mxu0 0.0
        %306 = vmatpush2.msra.mxu0 0.0
        %307 = vmatprep.subr.mxu0 0.0
        %308 = vmatpush2.msra.mxu0 0.0
        %309 = vmatprep.subr.mxu0 0.0
        %310 = vmatpush2.msra.mxu0 0.0
        %311 = vmatprep.subr.mxu0 0.0
        %312 = vmatpush2.msra.mxu0 0.0
        %313 = vmatprep.subr.mxu0 0.0
        %314 = vmatpush2.msra.mxu0 0.0
        %315 = vmatprep.subr.mxu0 0.0
        %316 = vmatpush2.msra.mxu0 0.0
        %317 = vmatprep.subr.mxu0 0.0
        %318 = vmatpush2.msra.mxu0 0.0
        %319 = vmatprep.subr.mxu0 0.0
        %320 = vmatpush2.msra.mxu0 0.0
        %321 = vmatprep.subr.mxu0 0.0
        %322 = vmatpush2.msra.mxu0 0.0
        %323 = vmatprep.subr.mxu0 0.0
        %324 = vmatpush2.msra.mxu0 0.0
        %325 = vmatprep.subr.mxu0 0.0
        %326 = vmatpush2.msra.mxu0 0.0
        %327 = vmatprep.subr.mxu0 0.0
        %328 = vmatpush2.msra.mxu0 0.0
        %329 = vmatprep.subr.mxu0 0.0
        %330 = vmatpush2.msra.mxu0 0.0
        %331 = vmatprep.mubr.f32.mxu0 0.0
        %332 = vmatmul.mubr.f32.gmra.mxu0 %v201
        %v333 = vpop.f32.mrf.mxu0
        %v334 = vadd.f32 %v255, %v333
        %v335 = vpop.f32.mrf.mxu0
        %v336 = vadd.f32 %v259, %v335
        %337 = vdwg.mxu0
        %338 = vmatprep.subr.mxu0 0.0
        %339 = vmatpush1.msra.mxu0 %v249
        %340 = vmatprep.subr.mxu0 0.0
        %341 = vmatpush1.msra.mxu0 %v246
        %342 = vmatprep.subr.mxu0 0.0
        %343 = vmatpush1.msra.mxu0 %v243
        %344 = vmatprep.subr.mxu0 0.0
        %345 = vmatpush1.msra.mxu0 %v240
        %346 = vmatprep.subr.mxu0 0.0
        %347 = vmatpush1.msra.mxu0 %v237
        %348 = vmatprep.subr.mxu0 0.0
        %349 = vmatpush1.msra.mxu0 %v234
        %350 = vmatprep.subr.mxu0 0.0
        %351 = vmatpush1.msra.mxu0 %v231
        %352 = vmatprep.subr.mxu0 0.0
        %353 = vmatpush1.msra.mxu0 %v228
        %354 = vmatprep.subr.mxu0 0.0
        %355 = vmatpush1.msra.mxu0 %v225
        %356 = vmatprep.subr.mxu0 0.0
        %357 = vmatpush1.msra.mxu0 %v222
        %358 = vmatprep.subr.mxu0 0.0
        %359 = vmatpush1.msra.mxu0 %v219
        %360 = vmatprep.subr.mxu0 0.0
        %361 = vmatpush1.msra.mxu0 %v216
        %362 = vmatprep.subr.mxu0 0.0
        %363 = vmatpush1.msra.mxu0 %v213
        %364 = vmatprep.subr.mxu0 0.0
        %365 = vmatpush1.msra.mxu0 %v210
        %366 = vmatprep.subr.mxu0 0.0
        %367 = vmatpush1.msra.mxu0 %v207
        %368 = vmatprep.subr.mxu0 0.0
        %369 = vmatpush1.msra.mxu0 %v204
        %370 = vmatprep.subr.mxu0 0.0
        %371 = vmatpush2.msra.mxu0 0.0
        %372 = vmatprep.subr.mxu0 0.0
        %373 = vmatpush2.msra.mxu0 0.0
        %374 = vmatprep.subr.mxu0 0.0
        %375 = vmatpush2.msra.mxu0 0.0
        %376 = vmatprep.subr.mxu0 0.0
        %377 = vmatpush2.msra.mxu0 0.0
        %378 = vmatprep.subr.mxu0 0.0
        %379 = vmatpush2.msra.mxu0 0.0
        %380 = vmatprep.subr.mxu0 0.0
        %381 = vmatpush2.msra.mxu0 0.0
        %382 = vmatprep.subr.mxu0 0.0
        %383 = vmatpush2.msra.mxu0 0.0
        %384 = vmatprep.subr.mxu0 0.0
        %385 = vmatpush2.msra.mxu0 0.0
        %386 = vmatprep.subr.mxu0 0.0
        %387 = vmatpush2.msra.mxu0 0.0
        %388 = vmatprep.subr.mxu0 0.0
        %389 = vmatpush2.msra.mxu0 0.0
        %390 = vmatprep.subr.mxu0 0.0
        %391 = vmatpush2.msra.mxu0 0.0
        %392 = vmatprep.subr.mxu0 0.0
        %393 = vmatpush2.msra.mxu0 0.0
        %394 = vmatprep.subr.mxu0 0.0
        %395 = vmatpush2.msra.mxu0 0.0
        %396 = vmatprep.subr.mxu0 0.0
        %397 = vmatpush2.msra.mxu0 0.0
        %398 = vmatprep.subr.mxu0 0.0
        %399 = vmatpush2.msra.mxu0 0.0
        %400 = vmatprep.subr.mxu0 0.0
        %401 = vmatpush2.msra.mxu0 0.0
        %402 = vmatprep.mubr.f32.mxu0 0.0
        %403 = vmatmul.mubr.f32.gmra.mxu0 %v201
        %v404 = vpop.f32.mrf.mxu0
        %v405 = vadd.f32 %v263, %v404
        %v406 = vpop.f32.mrf.mxu0
        %407 = vdwg.mxu0
        %408 = vst [vmem:[%s200] sm:$0xff] %v334
        %409 = vst [vmem:[%s200 + $0x8] sm:$0xff] %v336
        %410 = vst [vmem:[%s200 + $0x10] sm:$0xff] %v405
        %s411 = sand.u32 %s97, 1
        %s412 = scalar_lea.sflag [#allocation4], %s411
        %s413 = sand.u32 %s97, 1
        %s414 = smul.addr %s413, 24
        %s415 = scalar_lea.vmem [#allocation7], %s414
        // Predicated region
        $region41: #{tpu_custom_call.1} parent=31 // pred_check
          %p416 = pneg %p107
        $region42: #{tpu_custom_call.1} parent=31 // pred_check_branch
          %418 = sbr.rel (%p416) target = $region44
        $region43: #{tpu_custom_call.1} parent=31 // pred_region
          %s420 = ssub.s32 384, 384
          %421 = vsyncadd %s412, %s420
          %s422 = smul.addr %s21, 3
          %s423 = smul.addr %s422, 128
          %s424 = scalar_lea.hbm %s3, %s423
          %s426 = sshll.u32 %s415, 4
          %s427 = int_to_ptr.vmem [resolvable:$true] %s426
          %429 = dma.vmem_to_hbm [thread:$0]  %s427, 384, %s424, %s412
        $region44: #{tpu_custom_call.1} parent=31 // pred_fallthru
          _
      $region32: #{tpu_custom_call.1} parent=5 // pred_fallthru
        _
      %p430 = scmp.le.s32.totalorder 2, %s16
      // Predicated region
      $region45: #{tpu_custom_call.1} parent=5 // pred_check
        %p431 = pneg %p430
      $region46: #{tpu_custom_call.1} parent=5 // pred_check_branch
        %433 = sbr.rel (%p431) target = $region48
      $region47: #{tpu_custom_call.1} parent=5 // pred_region
        %s434 = ssub.s32 %s16, 2
        // Predicated region
        $region49: #{tpu_custom_call.1} parent=47 // pred_check
          %p435 = pneg %p113
        $region50: #{tpu_custom_call.1} parent=47 // pred_check_branch
          %437 = sbr.rel (%p435) target = $region52
        $region51: #{tpu_custom_call.1} parent=47 // pred_region
          %s438 = sand.u32 %s98, 1
          %s439 = scalar_lea.sflag [#allocation4], %s438
          %s440 = sand.u32 %s98, 1
          %s441 = smul.addr %s440, 24
          %s442 = scalar_lea.vmem [#allocation7], %s441
          %443 = dma.done %s439, 384
        $region52: #{tpu_custom_call.1} parent=47 // pred_fallthru
          _
      $region48: #{tpu_custom_call.1} parent=5 // pred_fallthru
        _
    $region6: #{tpu_custom_call.1} parent=1 // loop_footer
      %s20 = sadd.s32 1, %s16
    $region7: #{tpu_custom_call.1} parent=1 // loop_footer_branch
      %15 = sbr.rel target = $region3
    $region8: #{tpu_custom_call.1} parent=1 // loop_exit
      _
    %444 = vsyncpa [#allocation3], 1
    %s445 = scalar_lea.sflag [#allocation3], 1
    %446 = vsyncpa %s445, 1
    %447 = vsyncpa [#allocation6], 1
    %448 = vsyncpa [#allocation4], 1
    %s449 = scalar_lea.sflag [#allocation4], 1
    %450 = vsyncpa %s449, 1

</llo_original>
